<compile_context>
chip_gen: v7x
topology: tpu7x:2x2x1
jax: 0.10.0
libtpu: 0.0.40
codegen_flags: <defaults>
</compile_context>

<pallas_src>
import functools

import jax
import jax.numpy as jnp
from jax.experimental import pallas as pl
from jax.experimental.pallas import tpu as pltpu

_LANE = 128
_SUBLANE = 8


def _layernorm_f32(x, gamma_ref, beta_ref, *, eps, d_true):
    """LayerNorm over the lane axis of a (TR, Dp) fp32 slab.

    Only the first `d_true` lanes participate in the reduction; padded lanes
    produce 0 (gamma/beta are zero-padded there).
    """
    d_pad = x.shape[-1]
    if d_true == d_pad:
        mean = jnp.mean(x, axis=-1, keepdims=True)
        xc = x - mean
        var = jnp.mean(xc * xc, axis=-1, keepdims=True)       # biased (torch)
    else:
        lane = jax.lax.broadcasted_iota(jnp.int32, x.shape, dimension=1)
        mask = (lane < d_true).astype(jnp.float32)
        inv_d = 1.0 / float(d_true)
        mean = jnp.sum(x * mask, axis=-1, keepdims=True) * inv_d
        xc = (x - mean) * mask
        var = jnp.sum(xc * xc, axis=-1, keepdims=True) * inv_d

    inv = jax.lax.rsqrt(var + eps)
    # Hoisted (1, Dp) fp32 scale/shift rows; single broadcast each.
    g = gamma_ref[...].astype(jnp.float32)
    b = beta_ref[...].astype(jnp.float32)
    return xc * inv * g + b


def _resid_ln_kernel(x_ref, gamma_ref, beta_ref, out_ref, *, eps, d_true):
    """Eval-mode: out = x + LayerNorm(x).  One grid step = (row_tile, Dp)."""
    x = x_ref[...].astype(jnp.float32)
    y = _layernorm_f32(x, gamma_ref, beta_ref, eps=eps, d_true=d_true)
    out_ref[...] = (x + y).astype(out_ref.dtype)


def _resid_ln_dropout_kernel(x_ref, gamma_ref, beta_ref, bits_ref, out_ref, *,
                             eps, d_true, threshold, scale):
    """Training-mode: out = x + inverted_dropout(LayerNorm(x))."""
    x = x_ref[...].astype(jnp.float32)
    y = _layernorm_f32(x, gamma_ref, beta_ref, eps=eps, d_true=d_true)
    # Integer-threshold Bernoulli mask: P(keep) = 1 - dropout_p.
    keep = bits_ref[...] >= jnp.uint32(threshold)
    y = jnp.where(keep, y * scale, 0.0)
    out_ref[...] = (x + y).astype(out_ref.dtype)


def _pick_row_tile(n_rows, d_pad, requested):
    if requested is not None:
        rt = max(_SUBLANE, (int(requested) // _SUBLANE) * _SUBLANE)
        return rt
    # Aim for a ~2 MiB fp32 input block, capped at 1024 rows, but never pad a
    # tiny input far past its real row count.
    target_bytes = 2 * 1024 * 1024
    rt = max(_SUBLANE, min(1024, target_bytes // (d_pad * 4)))
    rt = (rt // _SUBLANE) * _SUBLANE
    n_min = ((n_rows + _SUBLANE - 1) // _SUBLANE) * _SUBLANE
    rt = min(rt, n_min)
    return max(_SUBLANE, (rt // _SUBLANE) * _SUBLANE)


def residual_connections(x, gamma, beta, *, eps=1e-5, dropout_p=0.1,
                         training=False, rng_key=None, row_tile=None):
    """x: (..., D) float array. gamma/beta: (D,) LayerNorm affine params."""
    orig_shape = x.shape
    D = orig_shape[-1]
    x2 = x.reshape(-1, D)
    N = x2.shape[0]

    # Lane-dense padding of the normalized axis.
    Dp = max(_LANE, pl.cdiv(D, _LANE) * _LANE)
    rt = _pick_row_tile(N, Dp, row_tile)
    Np = pl.cdiv(N, rt) * rt

    if Np != N or Dp != D:
        x2 = jnp.pad(x2, ((0, Np - N), (0, Dp - D)))
    g2 = jnp.pad(gamma.reshape(1, D), ((0, 0), (0, Dp - D)))
    b2 = jnp.pad(beta.reshape(1, D), ((0, 0), (0, Dp - D)))

    grid = (Np // rt,)
    row_spec = pl.BlockSpec((rt, Dp), lambda i: (i, 0))
    par_spec = pl.BlockSpec((1, Dp), lambda i: (0, 0))

    # Explicit VMEM budget: ~double-buffered in/out/bits blocks + headroom,
    # kept well under v7x's 64 MiB physical VMEM.
    blk_bytes = rt * Dp * 4
    vmem_limit = int(min(48 * 1024 * 1024, max(4 * 1024 * 1024, 12 * blk_bytes)))
    cparams = pltpu.CompilerParams(
        dimension_semantics=("parallel",),
        vmem_limit_bytes=vmem_limit,
    )
    out_shape = jax.ShapeDtypeStruct((Np, Dp), x.dtype)

    use_dropout = training and float(dropout_p) > 0.0
    if use_dropout:
        if rng_key is None:
            rng_key = jax.random.PRNGKey(0)
        bits = jax.random.bits(rng_key, (Np, Dp), dtype=jnp.uint32)
        p = float(dropout_p)
        threshold = min(int(round(p * 4294967296.0)), 4294967295)
        kernel = functools.partial(
            _resid_ln_dropout_kernel, eps=float(eps), d_true=D,
            threshold=threshold, scale=1.0 / (1.0 - p))
        out = pl.pallas_call(
            kernel,
            out_shape=out_shape,
            grid=grid,
            in_specs=[row_spec, par_spec, par_spec, row_spec],
            out_specs=row_spec,
            compiler_params=cparams,
        )(x2, g2, b2, bits)
    else:
        kernel = functools.partial(_resid_ln_kernel, eps=float(eps), d_true=D)
        out = pl.pallas_call(
            kernel,
            out_shape=out_shape,
            grid=grid,
            in_specs=[row_spec, par_spec, par_spec],
            out_specs=row_spec,
            compiler_params=cparams,
        )(x2, g2, b2)

    if Np != N or Dp != D:
        out = out[:N, :D]
    return out.reshape(orig_shape)


def _reference_eval(x, gamma, beta, eps=1e-5):
    x32 = x.astype(jnp.float32)
    mean = jnp.mean(x32, axis=-1, keepdims=True)
    var = jnp.mean((x32 - mean) ** 2, axis=-1, keepdims=True)
    ln = (x32 - mean) * jax.lax.rsqrt(var + eps) * gamma + beta
    return (x32 + ln).astype(x.dtype)


if __name__ == "__main__":
    batch, seq, model_dimension = 2, 8, 32
    dropout = 0.1

    key = jax.random.PRNGKey(0)
    k_x, k_drop = jax.random.split(key)
    x = jax.random.normal(k_x, (batch, seq, model_dimension), dtype=jnp.float32)

    # nn.LayerNorm default affine init.
    gamma = jnp.ones((model_dimension,), dtype=jnp.float32)
    beta = jnp.zeros((model_dimension,), dtype=jnp.float32)

    # Eval-mode forward (nn.Dropout is identity in eval).
    out = residual_connections(x, gamma, beta, dropout_p=dropout, training=False)
    out = jax.block_until_ready(out)

    ref = _reference_eval(x, gamma, beta)
    assert jnp.allclose(out, ref, atol=1e-5, rtol=1e-5), "mismatch vs reference"

    # Training-mode forward (inverted dropout with wrapper-generated bits).
    out_train = jax.block_until_ready(
        residual_connections(x, gamma, beta, dropout_p=dropout,
                             training=True, rng_key=k_drop))
    assert out_train.shape == x.shape
    assert bool(jnp.all(jnp.isfinite(out_train)))

    print("KERNEL_OK")
</pallas_src>

<mosaic_0001>
module attributes {stable_mosaic.version = 11 : i64} {
  func.func @_resid_ln_kernel(%arg0: i32, %arg1: memref<16x128xf32, #tpu.memory_space<vmem>>, %arg2: memref<1x128xf32, #tpu.memory_space<vmem>>, %arg3: memref<1x128xf32, #tpu.memory_space<vmem>>, %arg4: memref<16x128xf32, #tpu.memory_space<vmem>>) attributes {dimension_semantics = [#tpu.dimension_semantics<parallel>], iteration_bounds = array<i64: 1>, scalar_prefetch = 0 : i64, scratch_operands = 0 : i64, tpu.core_type = #tpu.core_type<tc>, window_params = [{transform_indices = @transform_0, window_bounds = array<i64: 16, 128>}, {pipeline_mode = #tpu.pipeline_mode<synchronous>, transform_indices = @transform_1, window_bounds = array<i64: 1, 128>}, {pipeline_mode = #tpu.pipeline_mode<synchronous>, transform_indices = @transform_2, window_bounds = array<i64: 1, 128>}, {transform_indices = @transform_3, window_bounds = array<i64: 16, 128>}]} {
    %c0 = arith.constant 0 : index
    %c0_0 = arith.constant 0 : index
    %0 = vector.load %arg1[%c0, %c0_0] : memref<16x128xf32, #tpu.memory_space<vmem>>, vector<16x128xf32>
    %1 = tpu.iota {dimensions = array<i32: 1>} : vector<16x128xi32>
    %c32_i32 = arith.constant 32 : i32
    %2 = vector.broadcast %c32_i32 : i32 to vector<16x128xi32>
    %3 = arith.cmpi slt, %1, %2 : vector<16x128xi32>
    %4 = arith.extui %3 : vector<16x128xi1> to vector<16x128xi32>
    %5 = arith.sitofp %4 : vector<16x128xi32> to vector<16x128xf32>
    %6 = arith.mulf %0, %5 : vector<16x128xf32>
    %cst = arith.constant dense<0.000000e+00> : vector<16xf32>
    %7 = vector.multi_reduction <add>, %6, %cst [1] : vector<16x128xf32> to vector<16xf32>
    %8 = vector.shape_cast %7 : vector<16xf32> to vector<16x1xf32>
    %cst_1 = arith.constant 3.125000e-02 : f32
    %9 = vector.broadcast %cst_1 : f32 to vector<16x1xf32>
    %10 = arith.mulf %8, %9 : vector<16x1xf32>
    %11 = vector.broadcast %10 : vector<16x1xf32> to vector<16x128xf32>
    %12 = arith.subf %0, %11 : vector<16x128xf32>
    %13 = arith.mulf %12, %5 : vector<16x128xf32>
    %14 = arith.mulf %13, %13 : vector<16x128xf32>
    %cst_2 = arith.constant dense<0.000000e+00> : vector<16xf32>
    %15 = vector.multi_reduction <add>, %14, %cst_2 [1] : vector<16x128xf32> to vector<16xf32>
    %16 = vector.shape_cast %15 : vector<16xf32> to vector<16x1xf32>
    %cst_3 = arith.constant 3.125000e-02 : f32
    %17 = vector.broadcast %cst_3 : f32 to vector<16x1xf32>
    %18 = arith.mulf %16, %17 : vector<16x1xf32>
    %cst_4 = arith.constant 9.99999974E-6 : f32
    %19 = vector.broadcast %cst_4 : f32 to vector<16x1xf32>
    %20 = arith.addf %18, %19 : vector<16x1xf32>
    %21 = math.rsqrt %20 : vector<16x1xf32>
    %c0_5 = arith.constant 0 : index
    %c0_6 = arith.constant 0 : index
    %22 = vector.load %arg2[%c0_5, %c0_6] : memref<1x128xf32, #tpu.memory_space<vmem>>, vector<1x128xf32>
    %c0_7 = arith.constant 0 : index
    %c0_8 = arith.constant 0 : index
    %23 = vector.load %arg3[%c0_7, %c0_8] : memref<1x128xf32, #tpu.memory_space<vmem>>, vector<1x128xf32>
    %24 = vector.broadcast %21 : vector<16x1xf32> to vector<16x128xf32>
    %25 = arith.mulf %13, %24 : vector<16x128xf32>
    %26 = vector.broadcast %22 : vector<1x128xf32> to vector<16x128xf32>
    %27 = arith.mulf %25, %26 : vector<16x128xf32>
    %28 = vector.broadcast %23 : vector<1x128xf32> to vector<16x128xf32>
    %29 = arith.addf %27, %28 : vector<16x128xf32>
    %30 = arith.addf %0, %29 : vector<16x128xf32>
    %c0_9 = arith.constant 0 : index
    %c0_10 = arith.constant 0 : index
    %31 = vector.load %arg4[%c0_9, %c0_10] : memref<16x128xf32, #tpu.memory_space<vmem>>, vector<16x128xf32>
    tpu.vector_store %arg4[%c0_9, %c0_10], %30 {strides = array<i32>} : memref<16x128xf32, #tpu.memory_space<vmem>>, vector<16x128xf32>,
    return
  }
  func.func @transform_0(%arg0: i32) -> (i32, i32) {
    %c0_i32 = arith.constant 0 : i32
    %c0_i32_0 = arith.constant 0 : i32
    return %arg0, %c0_i32 : i32, i32
  }
  func.func @transform_1(%arg0: i32) -> (i32, i32) {
    %c0_i32 = arith.constant 0 : i32
    %c0_i32_0 = arith.constant 0 : i32
    %c0_i32_1 = arith.constant 0 : i32
    return %c0_i32, %c0_i32_0 : i32, i32
  }
  func.func @transform_2(%arg0: i32) -> (i32, i32) {
    %c0_i32 = arith.constant 0 : i32
    %c0_i32_0 = arith.constant 0 : i32
    %c0_i32_1 = arith.constant 0 : i32
    return %c0_i32, %c0_i32_0 : i32, i32
  }
  func.func @transform_3(%arg0: i32) -> (i32, i32) {
    %c0_i32 = arith.constant 0 : i32
    %c0_i32_0 = arith.constant 0 : i32
    return %arg0, %c0_i32 : i32, i32
  }
}

</mosaic_0001>

<llo_original>
// kernel: tpu_custom_call.1
$region0: #{tpu_custom_call.1}
  #allocation0 [shape = 'u32[]', space=smem, size = 0x4, offset = 0x4, fixed_abs, tag = 'smem constant byte address 0x4 - core index']
  #allocation1 [shape = 'u32[144,128]{1,0:T(1,128)}', space=vmem, size = 0x12000, scoped, tag = 'internal scratch']
  %s0 = inlined_call_operand.hbm [shape: f32[16,128], index: 0, kind: input, shape index: {}]
  %s1 = inlined_call_operand.vmem [shape: f32[1,128], index: 1, kind: input, shape index: {}]
  %s2 = inlined_call_operand.vmem [shape: f32[1,128], index: 2, kind: input, shape index: {}]
  %s3 = inlined_call_operand.hbm [shape: f32[16,128], index: 3, kind: output, shape index: {}]
  %s4 = sld [smem:[#allocation0]]
  $region26: #{tpu_custom_call.1} parent=0
    _
  %s6 = ssub.s32 1, %s4
  %s7 = scalar_select 0, %s6, %s4
  $region1: #{tpu_custom_call.1} parent=0
    #allocation2 [shape = 'u8[8192]{0}', space=vmem, size = 0x2000, scoped, tag = 'input window, operand 0, single buffered']
    #allocation3 [shape = 's32[1]{0}', space=sflag, size = 0x4, scoped, tag = 'scoped memory for tpu_custom_call.1']
    #allocation4 [shape = 's32[1]{0}', space=sflag, size = 0x4, scoped, tag = 'scoped memory for tpu_custom_call.1']
    #allocation5 [shape = 'u8[8192]{0}', space=vmem, size = 0x2000, scoped, tag = 'output window, operand 0, single buffered']
    %8 = vsyncpa [#allocation3], 0
    %9 = vsyncpa [#allocation4], 0
    // Predicated region
    $region2: #{tpu_custom_call.1} parent=1 // pred_check
      _
    $region3: #{tpu_custom_call.1} parent=1 // pred_check_branch
      %11 = sbr.rel (0) target = $region5
    $region4: #{tpu_custom_call.1} parent=1 // pred_region
      %s13 = ssub.s32 256, 256
      %14 = vsyncadd [#allocation3], %s13
      %s15 = sshll.u32 [#allocation2], 4
      %s16 = int_to_ptr.vmem [resolvable:$true] %s15
      %21 = dma.hbm_to_vmem [thread:$0]  %s0, 256, %s16, [#allocation3], 128, 128, 8
    $region5: #{tpu_custom_call.1} parent=1 // pred_fallthru
      _
    // Predicated region
    $region6: #{tpu_custom_call.1} parent=1 // pred_check
      _
    $region7: #{tpu_custom_call.1} parent=1 // pred_check_branch
      %23 = sbr.rel (0) target = $region9
    $region8: #{tpu_custom_call.1} parent=1 // pred_region
      _
    $region9: #{tpu_custom_call.1} parent=1 // pred_fallthru
      _
    // Predicated region
    $region10: #{tpu_custom_call.1} parent=1 // pred_check
      _
    $region11: #{tpu_custom_call.1} parent=1 // pred_check_branch
      %25 = sbr.rel (0) target = $region13
    $region12: #{tpu_custom_call.1} parent=1 // pred_region
      _
    $region13: #{tpu_custom_call.1} parent=1 // pred_fallthru
      _
    // Predicated region
    $region14: #{tpu_custom_call.1} parent=1 // pred_check
      _
    $region15: #{tpu_custom_call.1} parent=1 // pred_check_branch
      %27 = sbr.rel (0) target = $region17
    $region16: #{tpu_custom_call.1} parent=1 // pred_region
      %28 = dma.done [#allocation3], 256
    $region17: #{tpu_custom_call.1} parent=1 // pred_fallthru
      _
    %v29 = vld [vmem:[#allocation2] sm:$0xff]
    %v30 = vld [vmem:[#allocation2 + $0x8] sm:$0xff]
    %v31 = vlaneseq
    %v32 = vand.u32 %v31, 127
    %vm33 = vcmp.lt.s32.totalorder %v32, 32
    %v34 = vsel %vm33, 1, 0
    %v35 = vcvt.s32.f32 %v34
    %v36 = vmul.f32 %v29, %v35
    %v37 = vmul.f32 %v30, %v35
    %38 = vadd.xlane.f32.xlu0 %v36
    %v39 = vpop.xlane.xlu0 %38
    %40 = vadd.xlane.f32.xlu0 %v37
    %v41 = vpop.xlane.xlu0 %40
    %v42 = vmul.f32 %v39, 0.03125
    %v43 = vmul.f32 %v41, 0.03125
    %v44 = vsub.f32 %v29, %v42
    %v45 = vsub.f32 %v30, %v43
    %v46 = vmul.f32 %v44, %v35
    %v47 = vmul.f32 %v45, %v35
    %v48 = vmul.f32 %v46, %v46
    %v49 = vmul.f32 %v47, %v47
    %50 = vadd.xlane.f32.xlu0 %v48
    %v51 = vpop.xlane.xlu0 %50
    %52 = vadd.xlane.f32.xlu0 %v49
    %v53 = vpop.xlane.xlu0 %52
    %v54 = vmul.f32 %v51, 0.03125
    %v55 = vmul.f32 %v53, 0.03125
    %v56 = vadd.f32 %v54, 1e-05
    %v57 = vadd.f32 %v55, 1e-05
    %v58 = vrsqrt.pop %v56
    %v59 = vrsqrt.pop %v57
    %v60 = vld [vmem:[%s1] sm:$0x1]
    %v61 = vld [vmem:[%s2] sm:$0x1]
    %v62 = vmul.f32 %v46, %v58
    %v63 = vmul.f32 %v47, %v59
    %v65 = vlaneseq
    %v66 = vshrl.u32 %v65, 7
    %v67 = vsub.s32 0, %v66
    %v68 = vrot.slane %v60, %v67
    %v70 = vmul.f32 %v62, %v68
    %v71 = vmul.f32 %v63, %v68
    %v73 = vlaneseq
    %v74 = vshrl.u32 %v73, 7
    %v75 = vsub.s32 0, %v74
    %v76 = vrot.slane %v61, %v75
    %v78 = vadd.f32 %v70, %v76
    %v79 = vadd.f32 %v71, %v76
    %v80 = vadd.f32 %v29, %v78
    %v81 = vadd.f32 %v30, %v79
    %82 = vst [vmem:[#allocation5] sm:$0xff] %v80
    %83 = vst [vmem:[#allocation5 + $0x8] sm:$0xff] %v81
    // Predicated region
    $region18: #{tpu_custom_call.1} parent=1 // pred_check
      _
    $region19: #{tpu_custom_call.1} parent=1 // pred_check_branch
      %85 = sbr.rel (0) target = $region21
    $region20: #{tpu_custom_call.1} parent=1 // pred_region
      %s87 = ssub.s32 256, 256
      %88 = vsyncadd [#allocation4], %s87
      %s89 = sshll.u32 [#allocation5], 4
      %s90 = int_to_ptr.vmem [resolvable:$true] %s89
      %95 = dma.vmem_to_hbm [thread:$0]  %s90, 256, %s3, [#allocation4], 128, 128, 8
    $region21: #{tpu_custom_call.1} parent=1 // pred_fallthru
      _
    // Predicated region
    $region22: #{tpu_custom_call.1} parent=1 // pred_check
      _
    $region23: #{tpu_custom_call.1} parent=1 // pred_check_branch
      %97 = sbr.rel (0) target = $region25
    $region24: #{tpu_custom_call.1} parent=1 // pred_region
      %98 = dma.done [#allocation4], 256
    $region25: #{tpu_custom_call.1} parent=1 // pred_fallthru
      _
    %99 = vsyncpa [#allocation3], 1
    %100 = vsyncpa [#allocation4], 1

</llo_original>
